<compile_context>
chip_gen: v6e
topology: v6e:2x2x1
jax: 0.10.0
libtpu: 0.0.40
codegen_flags: <defaults>
</compile_context>

<pallas_src>
import functools

import jax
import jax.numpy as jnp
from jax.experimental import pallas as pl
from jax.experimental.pallas import tpu as pltpu


def _se_style_mixing_kernel(mode, bblk, x_ref, w1_ref, sh1_ref, w2_ref, sh2_ref, o_ref):
    # x_ref  : (B_blk, c, T)      pixels on lanes, channels on sublanes (stream dtype)
    # w1_ref : (B_blk, 2*oc, c)   conv1 weight * BN scale * se[b]            (MXU dtype)
    # sh1_ref: (B_blk, 2*oc, 1)   per-batch shift: conv1 bias + BN + style branch (f32)
    # w2_ref : (oc, 2*oc)         conv2 weight * BN scale                    (MXU dtype)
    # sh2_ref: (oc, 1)            conv2 bias + BN shift                      (f32)
    w2 = w2_ref[...]
    sh2 = sh2_ref[...]
    for i in range(bblk):                                    # static unroll, B_blk small
        x = x_ref[i]                                         # (c, T)
        # conv1 (BN scale + se folded into w1) + per-batch shift + LeakyReLU(0.1)
        h = jnp.dot(w1_ref[i], x, preferred_element_type=jnp.float32) + sh1_ref[i]
        h = jnp.maximum(h, 0.1 * h)
        # conv2 (+BN) + LeakyReLU(0.1): MXU operands in stream dtype, f32 accumulation
        o = jnp.dot(w2, h.astype(w2.dtype), preferred_element_type=jnp.float32) + sh2
        o = jnp.maximum(o, 0.1 * o)
        if mode == 'add':
            o = o + x.astype(jnp.float32)
        elif mode == 'mu':
            o = o * x.astype(jnp.float32)
        o_ref[i] = o.astype(o_ref.dtype)


def _round_up(n, m):
    return ((n + m - 1) // m) * m


def _pick_tile(hw, tile_px):
    """Lane tile: multiple of 128, <= tile_px, keeping padding waste modest."""
    tile_px = max(128, (tile_px // 128) * 128)
    full = _round_up(hw, 128)
    if full <= tile_px:
        return full
    t = tile_px
    while t >= 256:
        if _round_up(hw, t) - hw <= max(hw // 4, 128):
            return t
        t = max(128, (t // 2 // 128) * 128)
    return 128


def _pick_batch_block(b, grid_t, bytes_per_step, max_bblk=8):
    """Batch several images per grid step for tiny tiles, keeping >=2 grid instances."""
    if bytes_per_step > 128 * 1024:          # big tiles: step overhead already amortized
        return 1
    min_programs = min(2, b * grid_t)        # leave work for both v7x TensorCores
    best = 1
    for bb in range(1, min(b, max_bblk) + 1):
        if b % bb == 0 and (b // bb) * grid_t >= min_programs:
            best = bb
    return best


def se_style_mixing(x, se, style, params, mode='drop', tile_px=1024, eps=1e-5):
    """x: (b, c, h, w) NCHW; se, style: (b, c, 1, 1). Returns NCHW output in x.dtype."""
    assert mode in ('add', 'mu', 'drop')
    b, c, h, w = x.shape
    oc = params['w2'].shape[0]
    c2 = 2 * oc
    if mode in ('add', 'mu'):
        assert oc == c, "residual modes need output_channel == input_channel"
    hw = h * w

    stream_dtype = x.dtype
    mxu_dtype = jnp.bfloat16 if stream_dtype == jnp.bfloat16 else jnp.float32

    # ---- tiling: lane-dense pixel tiles, hw padded to a tile multiple -----------------
    tile = _pick_tile(hw, tile_px)
    hw_pad = _round_up(hw, tile)
    grid_t = hw_pad // tile
    bblk = _pick_batch_block(b, grid_t, (c + oc) * tile * x.dtype.itemsize)
    grid = (b // bblk, grid_t)

    # ---- glue: flatten spatial; NCHW is already channels-major, no transposes ---------
    x3 = x.reshape(b, c, hw)
    if hw_pad != hw:
        x3 = jnp.pad(x3, ((0, 0), (0, 0), (0, hw_pad - hw)))

    # ---- glue: fold conv bias + inference BN + se + style into weights / shifts -------
    f32 = jnp.float32
    w1 = params['w1'].astype(f32)                                   # (2*oc, 2*c)
    scale1 = params['g1'].astype(f32) / jnp.sqrt(params['var1'].astype(f32) + eps)
    w1a = scale1[:, None] * w1[:, :c]                               # BN scale folded
    w1b = w1a[None, :, :] * se.reshape(b, c).astype(f32)[:, None, :]  # (b, 2*oc, c), se folded
    style_proj = style.reshape(b, c).astype(f32) @ w1[:, c:].T      # style branch of conv1
    shift1 = (scale1[None, :]
              * (style_proj + (params['b1'] - params['mean1']).astype(f32)[None, :])
              + params['beta1'].astype(f32)[None, :])               # (b, 2*oc)
    shift1 = shift1[:, :, None]                                     # (b, 2*oc, 1), f32

    scale2 = params['g2'].astype(f32) / jnp.sqrt(params['var2'].astype(f32) + eps)
    w2f = scale2[:, None] * params['w2'].astype(f32)                # (oc, 2*oc)
    shift2 = (scale2 * (params['b2'] - params['mean2']).astype(f32)
              + params['beta2'].astype(f32))[:, None]               # (oc, 1), f32

    out3 = pl.pallas_call(
        functools.partial(_se_style_mixing_kernel, mode, bblk),
        out_shape=jax.ShapeDtypeStruct((b, oc, hw_pad), stream_dtype),
        grid_spec=pltpu.PrefetchScalarGridSpec(
            num_scalar_prefetch=0,
            grid=grid,
            in_specs=[
                pl.BlockSpec((bblk, c, tile), lambda bi, ti: (bi, 0, ti)),   # x stream
                pl.BlockSpec((bblk, c2, c),   lambda bi, ti: (bi, 0, 0)),    # w1b (per batch)
                pl.BlockSpec((bblk, c2, 1),   lambda bi, ti: (bi, 0, 0)),    # shift1 (per batch)
                pl.BlockSpec((oc, c2),        lambda bi, ti: (0, 0)),        # w2 (shared)
                pl.BlockSpec((oc, 1),         lambda bi, ti: (0, 0)),        # shift2 (shared)
            ],
            out_specs=pl.BlockSpec((bblk, oc, tile), lambda bi, ti: (bi, 0, ti)),
        ),
        compiler_params=pltpu.CompilerParams(
            dimension_semantics=("parallel", "parallel")),
    )(x3, w1b.astype(mxu_dtype), shift1, w2f.astype(mxu_dtype), shift2)

    if hw_pad != hw:
        out3 = out3[:, :, :hw]
    return out3.reshape(b, oc, h, w)


def _ref_forward(x, se, style, params, mode='drop', eps=1e-5):
    """Plain-JAX reference of the PyTorch forward (inference-mode BN)."""
    b, c, h, w = x.shape
    se_feature = x * se
    sty = jnp.broadcast_to(style, (b, c, h, w))
    f = jnp.concatenate([se_feature, sty], axis=1)                      # (b, 2c, h, w)
    y = jnp.einsum('bchw,oc->bohw', f, params['w1']) + params['b1'][None, :, None, None]
    y = (y - params['mean1'][None, :, None, None]) / jnp.sqrt(params['var1'] + eps)[None, :, None, None]
    y = y * params['g1'][None, :, None, None] + params['beta1'][None, :, None, None]
    y = jnp.where(y >= 0, y, 0.1 * y)
    z = jnp.einsum('bchw,oc->bohw', y, params['w2']) + params['b2'][None, :, None, None]
    z = (z - params['mean2'][None, :, None, None]) / jnp.sqrt(params['var2'] + eps)[None, :, None, None]
    z = z * params['g2'][None, :, None, None] + params['beta2'][None, :, None, None]
    z = jnp.where(z >= 0, z, 0.1 * z)
    if mode == 'add':
        return z + x
    if mode == 'mu':
        return z * x
    return z


if __name__ == "__main__":
    key = jax.random.PRNGKey(0)
    ks = jax.random.split(key, 12)

    b, c, h, w = 2, 4, 16, 16      # input_channel = 4
    oc = 4                         # output_channel = 4

    x = jax.random.normal(ks[0], (b, c, h, w), jnp.float32)
    se = jax.nn.sigmoid(jax.random.normal(ks[1], (b, c, 1, 1), jnp.float32))
    style = jax.random.normal(ks[2], (b, c, 1, 1), jnp.float32)

    # Deterministic synthetic parameters (shapes from nn.Conv2d / nn.BatchNorm2d in __init__)
    params = dict(
        w1=0.1 * jax.random.normal(ks[3], (2 * oc, 2 * c), jnp.float32),   # Conv2d(2c -> 2*oc, 1x1)
        b1=0.1 * jax.random.normal(ks[4], (2 * oc,), jnp.float32),
        g1=1.0 + 0.1 * jax.random.normal(ks[5], (2 * oc,), jnp.float32),   # BN(2*oc) weight
        beta1=0.1 * jax.random.normal(ks[6], (2 * oc,), jnp.float32),      # BN(2*oc) bias
        mean1=jnp.zeros((2 * oc,), jnp.float32),
        var1=jnp.ones((2 * oc,), jnp.float32),
        w2=0.1 * jax.random.normal(ks[7], (oc, 2 * oc), jnp.float32),      # Conv2d(2*oc -> oc, 1x1)
        b2=0.1 * jax.random.normal(ks[8], (oc,), jnp.float32),
        g2=1.0 + 0.1 * jax.random.normal(ks[9], (oc,), jnp.float32),       # BN(oc) weight
        beta2=0.1 * jax.random.normal(ks[10], (oc,), jnp.float32),         # BN(oc) bias
        mean2=jnp.zeros((oc,), jnp.float32),
        var2=jnp.ones((oc,), jnp.float32),
    )

    # ---- float32 path: exact (f32 streams, f32 MXU, BN/se/style folding only) --------
    for mode in ('drop', 'add', 'mu'):
        out = jax.block_until_ready(se_style_mixing(x, se, style, params, mode=mode))
        ref = _ref_forward(x, se, style, params, mode=mode)
        assert out.shape == (b, oc, h, w), out.shape
        assert out.dtype == x.dtype, out.dtype
        assert jnp.allclose(out, ref, atol=1e-4, rtol=1e-4), (
            mode, float(jnp.max(jnp.abs(out - ref))))

    # ---- bf16 streaming path: half the HBM bytes, f32 accumulation --------------------
    x_bf = x.astype(jnp.bfloat16)
    for mode in ('drop', 'add', 'mu'):
        out = jax.block_until_ready(se_style_mixing(x_bf, se, style, params, mode=mode))
        assert out.dtype == jnp.bfloat16, out.dtype
        ref = _ref_forward(x_bf.astype(jnp.float32), se, style, params, mode=mode)
        err = float(jnp.max(jnp.abs(out.astype(jnp.float32) - ref)))
        assert err < 5e-2, (mode, err)

    print("KERNEL_OK")
</pallas_src>

<mosaic_0001>
module attributes {stable_mosaic.version = 11 : i64} {
  func.func @_se_style_mixing_kernel(%arg0: i32, %arg1: i32, %arg2: memref<1x4x256xf32, #tpu.memory_space<vmem>>, %arg3: memref<1x8x4xf32, #tpu.memory_space<vmem>>, %arg4: memref<1x8x1xf32, #tpu.memory_space<vmem>>, %arg5: memref<4x8xf32, #tpu.memory_space<vmem>>, %arg6: memref<4x1xf32, #tpu.memory_space<vmem>>, %arg7: memref<1x4x256xf32, #tpu.memory_space<vmem>>) attributes {dimension_semantics = [#tpu.dimension_semantics<parallel>, #tpu.dimension_semantics<parallel>], iteration_bounds = array<i64: 2, 1>, scalar_prefetch = 0 : i64, scratch_operands = 0 : i64, tpu.core_type = #tpu.core_type<tc>, window_params = [{transform_indices = @transform_0, window_bounds = array<i64: 1, 4, 256>}, {transform_indices = @transform_1, window_bounds = array<i64: 1, 8, 4>}, {transform_indices = @transform_2, window_bounds = array<i64: 1, 8, 1>}, {pipeline_mode = #tpu.pipeline_mode<synchronous>, transform_indices = @transform_3, window_bounds = array<i64: 4, 8>}, {pipeline_mode = #tpu.pipeline_mode<synchronous>, transform_indices = @transform_4, window_bounds = array<i64: 4, 1>}, {transform_indices = @transform_5, window_bounds = array<i64: 1, 4, 256>}]} {
    %c0 = arith.constant 0 : index
    %c0_0 = arith.constant 0 : index
    %0 = vector.load %arg5[%c0, %c0_0] : memref<4x8xf32, #tpu.memory_space<vmem>>, vector<4x8xf32>
    %c0_1 = arith.constant 0 : index
    %c0_2 = arith.constant 0 : index
    %1 = vector.load %arg6[%c0_1, %c0_2] : memref<4x1xf32, #tpu.memory_space<vmem>>, vector<4x1xf32>
    %c0_3 = arith.constant 0 : index
    %c0_4 = arith.constant 0 : index
    %c0_5 = arith.constant 0 : index
    %2 = vector.load %arg2[%c0_3, %c0_4, %c0_5] : memref<1x4x256xf32, #tpu.memory_space<vmem>>, vector<1x4x256xf32>
    %3 = vector.shape_cast %2 : vector<1x4x256xf32> to vector<4x256xf32>
    %c0_6 = arith.constant 0 : index
    %c0_7 = arith.constant 0 : index
    %c0_8 = arith.constant 0 : index
    %4 = vector.load %arg3[%c0_6, %c0_7, %c0_8] : memref<1x8x4xf32, #tpu.memory_space<vmem>>, vector<1x8x4xf32>
    %5 = vector.shape_cast %4 : vector<1x8x4xf32> to vector<8x4xf32>
    %cst = arith.constant dense<0.000000e+00> : vector<8x256xf32>
    %6 = tpu.matmul %5, %3, %cst {dimension_numbers = #tpu.dot_dimension_numbers<[1], [0], [0], [1], [0, 0, 1, 1], [], []>} : vector<8x4xf32>, vector<4x256xf32>, vector<8x256xf32> -> vector<8x256xf32>
    %c0_9 = arith.constant 0 : index
    %c0_10 = arith.constant 0 : index
    %c0_11 = arith.constant 0 : index
    %7 = vector.load %arg4[%c0_9, %c0_10, %c0_11] : memref<1x8x1xf32, #tpu.memory_space<vmem>>, vector<1x8x1xf32>
    %8 = vector.shape_cast %7 : vector<1x8x1xf32> to vector<8x1xf32>
    %9 = vector.broadcast %8 : vector<8x1xf32> to vector<8x256xf32>
    %10 = arith.addf %6, %9 : vector<8x256xf32>
    %cst_12 = arith.constant 1.000000e-01 : f32
    %11 = vector.broadcast %cst_12 : f32 to vector<8x256xf32>
    %12 = arith.mulf %11, %10 : vector<8x256xf32>
    %13 = arith.maximumf %10, %12 : vector<8x256xf32>
    %cst_13 = arith.constant dense<0.000000e+00> : vector<4x256xf32>
    %14 = tpu.matmul %0, %13, %cst_13 {dimension_numbers = #tpu.dot_dimension_numbers<[1], [0], [0], [1], [0, 0, 1, 1], [], []>} : vector<4x8xf32>, vector<8x256xf32>, vector<4x256xf32> -> vector<4x256xf32>
    %15 = vector.broadcast %1 : vector<4x1xf32> to vector<4x256xf32>
    %16 = arith.addf %14, %15 : vector<4x256xf32>
    %cst_14 = arith.constant 1.000000e-01 : f32
    %17 = vector.broadcast %cst_14 : f32 to vector<4x256xf32>
    %18 = arith.mulf %17, %16 : vector<4x256xf32>
    %19 = arith.maximumf %16, %18 : vector<4x256xf32>
    %c0_15 = arith.constant 0 : index
    %c0_16 = arith.constant 0 : index
    %c0_17 = arith.constant 0 : index
    %20 = vector.load %arg7[%c0_15, %c0_16, %c0_17] : memref<1x4x256xf32, #tpu.memory_space<vmem>>, vector<1x4x256xf32>
    %21 = vector.shape_cast %20 : vector<1x4x256xf32> to vector<4x256xf32>
    %22 = vector.shape_cast %19 : vector<4x256xf32> to vector<1x4x256xf32>
    tpu.vector_store %arg7[%c0_15, %c0_16, %c0_17], %22 {strides = array<i32>} : memref<1x4x256xf32, #tpu.memory_space<vmem>>, vector<1x4x256xf32>,
    return
  }
  func.func @transform_0(%arg0: i32, %arg1: i32) -> (i32, i32, i32) {
    %c0_i32 = arith.constant 0 : i32
    %c0_i32_0 = arith.constant 0 : i32
    return %arg0, %c0_i32, %arg1 : i32, i32, i32
  }
  func.func @transform_1(%arg0: i32, %arg1: i32) -> (i32, i32, i32) {
    %c0_i32 = arith.constant 0 : i32
    %c0_i32_0 = arith.constant 0 : i32
    %c0_i32_1 = arith.constant 0 : i32
    return %arg0, %c0_i32, %c0_i32_0 : i32, i32, i32
  }
  func.func @transform_2(%arg0: i32, %arg1: i32) -> (i32, i32, i32) {
    %c0_i32 = arith.constant 0 : i32
    %c0_i32_0 = arith.constant 0 : i32
    %c0_i32_1 = arith.constant 0 : i32
    return %arg0, %c0_i32, %c0_i32_0 : i32, i32, i32
  }
  func.func @transform_3(%arg0: i32, %arg1: i32) -> (i32, i32) {
    %c0_i32 = arith.constant 0 : i32
    %c0_i32_0 = arith.constant 0 : i32
    %c0_i32_1 = arith.constant 0 : i32
    return %c0_i32, %c0_i32_0 : i32, i32
  }
  func.func @transform_4(%arg0: i32, %arg1: i32) -> (i32, i32) {
    %c0_i32 = arith.constant 0 : i32
    %c0_i32_0 = arith.constant 0 : i32
    %c0_i32_1 = arith.constant 0 : i32
    return %c0_i32, %c0_i32_0 : i32, i32
  }
  func.func @transform_5(%arg0: i32, %arg1: i32) -> (i32, i32, i32) {
    %c0_i32 = arith.constant 0 : i32
    %c0_i32_0 = arith.constant 0 : i32
    return %arg0, %c0_i32, %arg1 : i32, i32, i32
  }
}

</mosaic_0001>

<llo_original>
// kernel: tpu_custom_call.1
$region0: #{tpu_custom_call.1}
  #allocation0 [shape = 'u32[]', space=smem, size = 0x4, offset = 0x4, fixed_abs, tag = 'smem constant byte address 0x4 - core index']
  #allocation1 [shape = 'u32[144,128]{1,0:T(1,128)}', space=vmem, size = 0x12000, scoped, tag = 'internal scratch']
  %s0 = inlined_call_operand.vmem [shape: f32[2,4,256], index: 0, kind: input, shape index: {}]
  %s1 = inlined_call_operand.vmem [shape: f32[2,8,4], index: 1, kind: input, shape index: {}]
  %s2 = inlined_call_operand.vmem [shape: f32[2,8,1], index: 2, kind: input, shape index: {}]
  %s3 = inlined_call_operand.vmem [shape: f32[4,8], index: 3, kind: input, shape index: {}]
  %s4 = inlined_call_operand.vmem [shape: f32[4,1], index: 4, kind: input, shape index: {}]
  %s5 = inlined_call_operand.hbm [shape: f32[2,4,256], index: 5, kind: output, shape index: {}]
  %s6 = sld [smem:[#allocation0]]
  $region53: #{tpu_custom_call.1} parent=0
    _
  %s8 = ssub.s32 1, %s6
  %s9 = scalar_select 0, %s8, %s6
  $region1: #{tpu_custom_call.1} parent=0
    #allocation2 [shape = 'u8[8192]{0}', space=vmem, size = 0x2000, scoped, tag = 'output window, operand 0']
    #allocation3 [shape = 's32[2]{0}', space=sflag, size = 0x8, scoped, tag = 'scoped memory for tpu_custom_call.1']
    %10 = vsyncpa [#allocation3], 0
    %s11 = scalar_lea.sflag [#allocation3], 1
    %12 = vsyncpa %s11, 0
    loop: start=0, step=1, limit=4
    $region2: #{tpu_custom_call.1} parent=1 // loop_pre_header
      _
    $region3: #{tpu_custom_call.1} parent=1 // loop_header
      %s14 = sphi 0, %s18
      %p15 = scmp.ge.s32.totalorder %s14, 4
      %s21 = sphi 0, %s33
      %s22 = sphi 0, %s29
      %s23 = sphi 0, %s21
      %s24 = sphi 0, %s22
      %s25 = sphi 0, %s23
      %s26 = sphi 0, %s24
      %s38 = sphi 0, %s40
      %s41 = sphi 0, %s38
      %s42 = sphi 0, %s41
      %s58 = sphi 0, %s42
      %s64 = sphi 0, %s66
      %s67 = sphi 0, %s64
      %s68 = sphi 0, %s67
      %s84 = sphi 0, %s68
      %s90 = sphi 0, %s92
      %s93 = sphi 0, %s90
      %s94 = sphi 0, %s93
      %s110 = sphi 0, %s94
      %s114 = sphi 0, %s114
      %s116 = sphi 0, %s114
      %s117 = sphi 0, %s116
      %s131 = sphi 0, %s117
      %s135 = sphi 0, %s135
      %s137 = sphi 0, %s135
      %s138 = sphi 0, %s137
      %s152 = sphi 0, %s138
      %s160 = sphi 0, %s162
      %s163 = sphi 0, %s160
      %s164 = sphi 0, %s163
      %s180 = sphi 0, %s164
    $region4: #{tpu_custom_call.1} parent=1 // loop_header_branch
      %17 = sbr.rel (%p15) target = $region8
    $region5: #{tpu_custom_call.1} parent=1 // loop_body
      %s19 = ssub.s32 %s14, 1
      %s20 = ssub.s32 %s14, 2
      %s27 = sadd.s32 1, %s22
      %p28 = scmp.ge.s32.totalorder %s27, 1
      %s29 = scalar_select %p28, 0, %s27
      %s30 = sadd.s32 1, %s21
      %s31 = scalar_select %p28, %s30, %s21
      %p32 = scmp.ge.s32.totalorder %s31, 2
      %s33 = scalar_select %p32, 0, %s31
      %s34 = ssub.s32 %s21, %s33
      %s35 = ssub.s32 %s22, %s29
      %s36 = sor.u32 %s34, %s35
      %p37 = scmp.eq.s32.totalorder %s36, 0
      %s39 = sadd.s32 %s38, 1
      %s40 = scalar_select %p37, %s38, %s39
      %p43 = pneg %p37
      %p44 = scmp.eq.s32.totalorder %s14, 1
      %p45 = por %p43, %p44
      %p46 = scmp.ne.s32.totalorder %s38, %s41
      %p47 = scmp.eq.s32.totalorder %s14, 0
      %p48 = por %p46, %p47
      %p49 = scmp.ne.s32.totalorder %s38, %s41
      %p50 = scmp.eq.s32.totalorder %s19, 1
      %p51 = por %p49, %p50
      %p52 = scmp.ne.s32.totalorder %s41, %s42
      %p53 = scmp.eq.s32.totalorder %s19, 0
      %p54 = por %p52, %p53
      %p55 = scmp.ne.s32.totalorder %s41, %s42
      %p56 = scmp.eq.s32.totalorder %s20, 1
      %p57 = por %p55, %p56
      %p59 = scmp.ne.s32.totalorder %s42, %s58
      %p60 = scmp.eq.s32.totalorder %s20, 0
      %p61 = por %p59, %p60
      %s62 = ssub.s32 %s21, %s33
      %p63 = scmp.eq.s32.totalorder %s62, 0
      %s65 = sadd.s32 %s64, 1
      %s66 = scalar_select %p63, %s64, %s65
      %p69 = pneg %p63
      %p70 = scmp.eq.s32.totalorder %s14, 1
      %p71 = por %p69, %p70
      %p72 = scmp.ne.s32.totalorder %s64, %s67
      %p73 = scmp.eq.s32.totalorder %s14, 0
      %p74 = por %p72, %p73
      %p75 = scmp.ne.s32.totalorder %s64, %s67
      %p76 = scmp.eq.s32.totalorder %s19, 1
      %p77 = por %p75, %p76
      %p78 = scmp.ne.s32.totalorder %s67, %s68
      %p79 = scmp.eq.s32.totalorder %s19, 0
      %p80 = por %p78, %p79
      %p81 = scmp.ne.s32.totalorder %s67, %s68
      %p82 = scmp.eq.s32.totalorder %s20, 1
      %p83 = por %p81, %p82
      %p85 = scmp.ne.s32.totalorder %s68, %s84
      %p86 = scmp.eq.s32.totalorder %s20, 0
      %p87 = por %p85, %p86
      %s88 = ssub.s32 %s21, %s33
      %p89 = scmp.eq.s32.totalorder %s88, 0
      %s91 = sadd.s32 %s90, 1
      %s92 = scalar_select %p89, %s90, %s91
      %p95 = pneg %p89
      %p96 = scmp.eq.s32.totalorder %s14, 1
      %p97 = por %p95, %p96
      %p98 = scmp.ne.s32.totalorder %s90, %s93
      %p99 = scmp.eq.s32.totalorder %s14, 0
      %p100 = por %p98, %p99
      %p101 = scmp.ne.s32.totalorder %s90, %s93
      %p102 = scmp.eq.s32.totalorder %s19, 1
      %p103 = por %p101, %p102
      %p104 = scmp.ne.s32.totalorder %s93, %s94
      %p105 = scmp.eq.s32.totalorder %s19, 0
      %p106 = por %p104, %p105
      %p107 = scmp.ne.s32.totalorder %s93, %s94
      %p108 = scmp.eq.s32.totalorder %s20, 1
      %p109 = por %p107, %p108
      %p111 = scmp.ne.s32.totalorder %s94, %s110
      %p112 = scmp.eq.s32.totalorder %s20, 0
      %p113 = por %p111, %p112
      %s115 = sadd.s32 %s114, 1
      %p118 = scmp.eq.s32.totalorder %s14, 1
      %p119 = scmp.ne.s32.totalorder %s114, %s116
      %p120 = scmp.eq.s32.totalorder %s14, 0
      %p121 = por %p119, %p120
      %p122 = scmp.ne.s32.totalorder %s114, %s116
      %p123 = scmp.eq.s32.totalorder %s19, 1
      %p124 = por %p122, %p123
      %p125 = scmp.ne.s32.totalorder %s116, %s117
      %p126 = scmp.eq.s32.totalorder %s19, 0
      %p127 = por %p125, %p126
      %p128 = scmp.ne.s32.totalorder %s116, %s117
      %p129 = scmp.eq.s32.totalorder %s20, 1
      %p130 = por %p128, %p129
      %p132 = scmp.ne.s32.totalorder %s117, %s131
      %p133 = scmp.eq.s32.totalorder %s20, 0
      %p134 = por %p132, %p133
      %s136 = sadd.s32 %s135, 1
      %p139 = scmp.eq.s32.totalorder %s14, 1
      %p140 = scmp.ne.s32.totalorder %s135, %s137
      %p141 = scmp.eq.s32.totalorder %s14, 0
      %p142 = por %p140, %p141
      %p143 = scmp.ne.s32.totalorder %s135, %s137
      %p144 = scmp.eq.s32.totalorder %s19, 1
      %p145 = por %p143, %p144
      %p146 = scmp.ne.s32.totalorder %s137, %s138
      %p147 = scmp.eq.s32.totalorder %s19, 0
      %p148 = por %p146, %p147
      %p149 = scmp.ne.s32.totalorder %s137, %s138
      %p150 = scmp.eq.s32.totalorder %s20, 1
      %p151 = por %p149, %p150
      %p153 = scmp.ne.s32.totalorder %s138, %s152
      %p154 = scmp.eq.s32.totalorder %s20, 0
      %p155 = por %p153, %p154
      %s156 = ssub.s32 %s21, %s33
      %s157 = ssub.s32 %s22, %s29
      %s158 = sor.u32 %s156, %s157
      %p159 = scmp.eq.s32.totalorder %s158, 0
      %s161 = sadd.s32 %s160, 1
      %s162 = scalar_select %p159, %s160, %s161
      %p165 = pneg %p159
      %p166 = scmp.eq.s32.totalorder %s14, 1
      %p167 = por %p165, %p166
      %p168 = scmp.ne.s32.totalorder %s160, %s163
      %p169 = scmp.eq.s32.totalorder %s14, 0
      %p170 = por %p168, %p169
      %p171 = scmp.ne.s32.totalorder %s160, %s163
      %p172 = scmp.eq.s32.totalorder %s19, 1
      %p173 = por %p171, %p172
      %p174 = scmp.ne.s32.totalorder %s163, %s164
      %p175 = scmp.eq.s32.totalorder %s19, 0
      %p176 = por %p174, %p175
      %p177 = scmp.ne.s32.totalorder %s163, %s164
      %p178 = scmp.eq.s32.totalorder %s20, 1
      %p179 = por %p177, %p178
      %p181 = scmp.ne.s32.totalorder %s164, %s180
      %p182 = scmp.eq.s32.totalorder %s20, 0
      %p183 = por %p181, %p182
      %p184 = scmp.le.s32.totalorder 1, %s14
      %p185 = scmp.lt.s32.totalorder %s14, 3
      %p186 = pnand %p184, %p185
      %p187 = pneg %p186
      // Predicated region
      $region9: #{tpu_custom_call.1} parent=5 // pred_check
        _
      $region10: #{tpu_custom_call.1} parent=5 // pred_check_branch
        %189 = sbr.rel (%p186) target = $region12
      $region11: #{tpu_custom_call.1} parent=5 // pred_region
        %s190 = ssub.s32 %s14, 1
        // Predicated region
        $region13: #{tpu_custom_call.1} parent=11 // pred_check
          %p191 = pneg %p127
        $region14: #{tpu_custom_call.1} parent=11 // pred_check_branch
          %193 = sbr.rel (%p191) target = $region16
        $region15: #{tpu_custom_call.1} parent=11 // pred_region
          _
        $region16: #{tpu_custom_call.1} parent=11 // pred_fallthru
          _
        // Predicated region
        $region17: #{tpu_custom_call.1} parent=11 // pred_check
          %p194 = pneg %p148
        $region18: #{tpu_custom_call.1} parent=11 // pred_check_branch
          %196 = sbr.rel (%p194) target = $region20
        $region19: #{tpu_custom_call.1} parent=11 // pred_region
          _
        $region20: #{tpu_custom_call.1} parent=11 // pred_fallthru
          _
      $region12: #{tpu_custom_call.1} parent=5 // pred_fallthru
        _
      %p197 = scmp.lt.s32.totalorder %s14, 2
      // Predicated region
      $region21: #{tpu_custom_call.1} parent=5 // pred_check
        %p198 = pneg %p197
      $region22: #{tpu_custom_call.1} parent=5 // pred_check_branch
        %200 = sbr.rel (%p198) target = $region24
      $region23: #{tpu_custom_call.1} parent=5 // pred_region
        // Predicated region
        $region25: #{tpu_custom_call.1} parent=23 // pred_check
          %p201 = pneg %p48
        $region26: #{tpu_custom_call.1} parent=23 // pred_check_branch
          %203 = sbr.rel (%p201) target = $region28
        $region27: #{tpu_custom_call.1} parent=23 // pred_region
          %s204 = smul.u32 2, %s22
          %p205 = scmp.lt.s32.totalorder %s21, 1
          %s206 = scalar_select %p205, %s21, 1
          %p207 = scmp.lt.s32.totalorder %s204, 1
          %s208 = scalar_select %p207, %s204, 1
          %s209 = smul.addr %s206, 2
          %s210 = sadd.s32 %s208, %s209
          %s211 = smul.addr %s210, 4
          %s212 = scalar_lea.vmem %s0, %s211
          %s213 = smul.u32 2, %s22
        $region28: #{tpu_custom_call.1} parent=23 // pred_fallthru
          _
        // Predicated region
        $region29: #{tpu_custom_call.1} parent=23 // pred_check
          %p214 = pneg %p74
        $region30: #{tpu_custom_call.1} parent=23 // pred_check_branch
          %216 = sbr.rel (%p214) target = $region32
        $region31: #{tpu_custom_call.1} parent=23 // pred_region
          %p217 = scmp.lt.s32.totalorder %s21, 1
          %s218 = scalar_select %p217, %s21, 1
          %s219 = smul.addr %s218, 8
          %s220 = scalar_lea.vmem %s1, %s219
        $region32: #{tpu_custom_call.1} parent=23 // pred_fallthru
          _
        // Predicated region
        $region33: #{tpu_custom_call.1} parent=23 // pred_check
          %p221 = pneg %p100
        $region34: #{tpu_custom_call.1} parent=23 // pred_check_branch
          %223 = sbr.rel (%p221) target = $region36
        $region35: #{tpu_custom_call.1} parent=23 // pred_region
          %p224 = scmp.lt.s32.totalorder %s21, 1
          %s225 = scalar_select %p224, %s21, 1
          %s226 = smul.addr %s225, 8
          %s227 = scalar_lea.vmem %s2, %s226
        $region36: #{tpu_custom_call.1} parent=23 // pred_fallthru
          _
      $region24: #{tpu_custom_call.1} parent=5 // pred_fallthru
        _
      %p228 = scmp.le.s32.totalorder 1, %s14
      %p229 = scmp.lt.s32.totalorder %s14, 3
      %p230 = pnand %p228, %p229
      %p231 = pneg %p230
      // Predicated region
      $region37: #{tpu_custom_call.1} parent=5 // pred_check
        _
      $region38: #{tpu_custom_call.1} parent=5 // pred_check_branch
        %233 = sbr.rel (%p230) target = $region40
      $region39: #{tpu_custom_call.1} parent=5 // pred_region
        %s234 = ssub.s32 %s14, 1
        %s235 = smul.u32 2, %s24
        %p236 = scmp.lt.s32.totalorder %s23, 1
        %s237 = scalar_select %p236, %s23, 1
        %p238 = scmp.lt.s32.totalorder %s235, 1
        %s239 = scalar_select %p238, %s235, 1
        %s240 = smul.addr %s237, 2
        %s241 = sadd.s32 %s239, %s240
        %s242 = smul.addr %s241, 4
        %s243 = scalar_lea.vmem %s0, %s242
        %p244 = pneg %p54
        %p245 = pneg %p51
        %p246 = scmp.lt.s32.totalorder %s23, 1
        %s247 = scalar_select %p246, %s23, 1
        %s248 = smul.addr %s247, 8
        %s249 = scalar_lea.vmem %s1, %s248
        %p250 = pneg %p80
        %p251 = pneg %p77
        %p252 = scmp.lt.s32.totalorder %s23, 1
        %s253 = scalar_select %p252, %s23, 1
        %s254 = smul.addr %s253, 8
        %s255 = scalar_lea.vmem %s2, %s254
        %p256 = pneg %p106
        %p257 = pneg %p103
        %p258 = pneg %p127
        %p259 = pneg %p124
        %p260 = pneg %p148
        %p261 = pneg %p145
        %p262 = pneg %p176
        %p263 = pneg %p173
        %s264 = sand.u32 %s163, 1
        %s265 = scalar_lea.sflag [#allocation3], %s264
        %s266 = sand.u32 %s163, 1
        %s267 = smul.addr %s266, 8
        %s268 = scalar_lea.vmem [#allocation2], %s267
        %s269 = smul.u32 2, %s24
        %p270 = scmp.lt.s32.totalorder %s23, 1
        %s271 = scalar_select %p270, %s23, 1
        %p272 = scmp.lt.s32.totalorder %s269, 1
        %s273 = scalar_select %p272, %s269, 1
        %s274 = smul.addr %s271, 2
        %s275 = sadd.s32 %s273, %s274
        %s276 = smul.addr %s275, 4
        %s277 = scalar_lea.vmem %s0, %s276
        %s278 = smul.u32 2, %s24
        %p279 = scmp.lt.s32.totalorder %s23, 1
        %s280 = scalar_select %p279, %s23, 1
        %s281 = smul.addr %s280, 8
        %s282 = scalar_lea.vmem %s1, %s281
        %p283 = scmp.lt.s32.totalorder %s23, 1
        %s284 = scalar_select %p283, %s23, 1
        %s285 = smul.addr %s284, 8
        %s286 = scalar_lea.vmem %s2, %s285
        %s287 = smul.u32 2, %s24
        %v288 = vld [vmem:[%s3] sm:$0xf]
        %v289 = vld [vmem:[%s4] sm:$0xf]
        %v290 = vld [vmem:[%s277] sm:$0xff]
        %v291 = vld [vmem:[%s282] sm:$0xff]
        %v292 = vld [vmem:[%s286] sm:$0xff]
        %294 = vset.pattern.permute.xlu0 0
        %295 = vperm.xlu0 %294, %v292
        %v296 = vpop.permute.xlu0 %295
        %v299 = vcombine.high %v290, %v290
        %vm300 = vcmask 31744
        %v302 = vsel %vm300, %v291, 0
        %vm304 = vcmask 1043456
        %v305 = vsel %vm304, %v290, 0
        %v307 = vsel %vm304, %v299, 0
        %309 = vmatprep.subr.mxu0 0.0
        %310 = vmatpush1.msra.mxu0 0.0
        %311 = vmatprep.subr.mxu0 0.0
        %312 = vmatpush1.msra.mxu0 0.0
        %313 = vmatprep.subr.mxu0 0.0
        %314 = vmatpush1.msra.mxu0 0.0
        %315 = vmatprep.subr.mxu0 0.0
        %316 = vmatpush1.msra.mxu0 0.0
        %317 = vmatprep.subr.mxu0 0.0
        %318 = vmatpush1.msra.mxu0 0.0
        %319 = vmatprep.subr.mxu0 0.0
        %320 = vmatpush1.msra.mxu0 0.0
        %321 = vmatprep.subr.mxu0 0.0
        %322 = vmatpush1.msra.mxu0 0.0
        %323 = vmatprep.subr.mxu0 0.0
        %324 = vmatpush1.msra.mxu0 0.0
        %325 = vmatprep.subr.mxu0 0.0
        %326 = vmatpush1.msra.mxu0 0.0
        %327 = vmatprep.subr.mxu0 0.0
        %328 = vmatpush1.msra.mxu0 0.0
        %329 = vmatprep.subr.mxu0 0.0
        %330 = vmatpush1.msra.mxu0 0.0
        %331 = vmatprep.subr.mxu0 0.0
        %332 = vmatpush1.msra.mxu0 0.0
        %333 = vmatprep.subr.mxu0 0.0
        %334 = vmatpush1.msra.mxu0 0.0
        %335 = vmatprep.subr.mxu0 0.0
        %336 = vmatpush1.msra.mxu0 0.0
        %337 = vmatprep.subr.mxu0 0.0
        %338 = vmatpush1.msra.mxu0 0.0
        %339 = vmatprep.subr.mxu0 %v307
        %340 = vmatpush1.msra.mxu0 %v305
        %341 = vmatprep.subr.mxu0 0.0
        %342 = vmatpush2.msra.mxu0 0.0
        %343 = vmatprep.subr.mxu0 0.0
        %344 = vmatpush2.msra.mxu0 0.0
        %345 = vmatprep.subr.mxu0 0.0
        %346 = vmatpush2.msra.mxu0 0.0
        %347 = vmatprep.subr.mxu0 0.0
        %348 = vmatpush2.msra.mxu0 0.0
        %349 = vmatprep.subr.mxu0 0.0
        %350 = vmatpush2.msra.mxu0 0.0
        %351 = vmatprep.subr.mxu0 0.0
        %352 = vmatpush2.msra.mxu0 0.0
        %353 = vmatprep.subr.mxu0 0.0
        %354 = vmatpush2.msra.mxu0 0.0
        %355 = vmatprep.subr.mxu0 0.0
        %356 = vmatpush2.msra.mxu0 0.0
        %357 = vmatprep.subr.mxu0 0.0
        %358 = vmatpush2.msra.mxu0 0.0
        %359 = vmatprep.subr.mxu0 0.0
        %360 = vmatpush2.msra.mxu0 0.0
        %361 = vmatprep.subr.mxu0 0.0
        %362 = vmatpush2.msra.mxu0 0.0
        %363 = vmatprep.subr.mxu0 0.0
        %364 = vmatpush2.msra.mxu0 0.0
        %365 = vmatprep.subr.mxu0 0.0
        %366 = vmatpush2.msra.mxu0 0.0
        %367 = vmatprep.subr.mxu0 0.0
        %368 = vmatpush2.msra.mxu0 0.0
        %369 = vmatprep.subr.mxu0 0.0
        %370 = vmatpush2.msra.mxu0 0.0
        %371 = vmatprep.subr.mxu0 0.0
        %372 = vmatpush2.msra.mxu0 0.0
        %373 = vmatprep.mubr.f32.mxu0 0.0
        %374 = vmatmul.mubr.f32.gmra.mxu0 %v302
        %v375 = vpop.f32.mrf.mxu0
        %v376 = vadd.f32 %v296, %v375
        %v377 = vpop.f32.mrf.mxu0
        %v378 = vadd.f32 %v296, %v377
        %379 = vdwg.mxu0
        %v380 = vmul.f32 %v376, 0.1
        %v381 = vmul.f32 %v378, 0.1
        %v382 = vmax.f32 %v376, %v380
        %v383 = vmax.f32 %v378, %v381
        %385 = vset.pattern.permute.xlu0 0
        %386 = vperm.xlu0 %385, %v289
        %v387 = vpop.permute.xlu0 %386
        %vm389 = vcmask 64512
        %v391 = vsel %vm389, %v288, 0
        %393 = vmatprep.subr.mxu0 0.0
        %394 = vmatpush1.msra.mxu0 0.0
        %395 = vmatprep.subr.mxu0 0.0
        %396 = vmatpush1.msra.mxu0 0.0
        %397 = vmatprep.subr.mxu0 0.0
        %398 = vmatpush1.msra.mxu0 0.0
        %399 = vmatprep.subr.mxu0 0.0
        %400 = vmatpush1.msra.mxu0 0.0
        %401 = vmatprep.subr.mxu0 0.0
        %402 = vmatpush1.msra.mxu0 0.0
        %403 = vmatprep.subr.mxu0 0.0
        %404 = vmatpush1.msra.mxu0 0.0
        %405 = vmatprep.subr.mxu0 0.0
        %406 = vmatpush1.msra.mxu0 0.0
        %407 = vmatprep.subr.mxu0 0.0
        %408 = vmatpush1.msra.mxu0 0.0
        %409 = vmatprep.subr.mxu0 0.0
        %410 = vmatpush1.msra.mxu0 0.0
        %411 = vmatprep.subr.mxu0 0.0
        %412 = vmatpush1.msra.mxu0 0.0
        %413 = vmatprep.subr.mxu0 0.0
        %414 = vmatpush1.msra.mxu0 0.0
        %415 = vmatprep.subr.mxu0 0.0
        %416 = vmatpush1.msra.mxu0 0.0
        %417 = vmatprep.subr.mxu0 0.0
        %418 = vmatpush1.msra.mxu0 0.0
        %419 = vmatprep.subr.mxu0 0.0
        %420 = vmatpush1.msra.mxu0 0.0
        %421 = vmatprep.subr.mxu0 0.0
        %422 = vmatpush1.msra.mxu0 0.0
        %423 = vmatprep.subr.mxu0 %v383
        %424 = vmatpush1.msra.mxu0 %v382
        %425 = vmatprep.subr.mxu0 0.0
        %426 = vmatpush2.msra.mxu0 0.0
        %427 = vmatprep.subr.mxu0 0.0
        %428 = vmatpush2.msra.mxu0 0.0
        %429 = vmatprep.subr.mxu0 0.0
        %430 = vmatpush2.msra.mxu0 0.0
        %431 = vmatprep.subr.mxu0 0.0
        %432 = vmatpush2.msra.mxu0 0.0
        %433 = vmatprep.subr.mxu0 0.0
        %434 = vmatpush2.msra.mxu0 0.0
        %435 = vmatprep.subr.mxu0 0.0
        %436 = vmatpush2.msra.mxu0 0.0
        %437 = vmatprep.subr.mxu0 0.0
        %438 = vmatpush2.msra.mxu0 0.0
        %439 = vmatprep.subr.mxu0 0.0
        %440 = vmatpush2.msra.mxu0 0.0
        %441 = vmatprep.subr.mxu0 0.0
        %442 = vmatpush2.msra.mxu0 0.0
        %443 = vmatprep.subr.mxu0 0.0
        %444 = vmatpush2.msra.mxu0 0.0
        %445 = vmatprep.subr.mxu0 0.0
        %446 = vmatpush2.msra.mxu0 0.0
        %447 = vmatprep.subr.mxu0 0.0
        %448 = vmatpush2.msra.mxu0 0.0
        %449 = vmatprep.subr.mxu0 0.0
        %450 = vmatpush2.msra.mxu0 0.0
        %451 = vmatprep.subr.mxu0 0.0
        %452 = vmatpush2.msra.mxu0 0.0
        %453 = vmatprep.subr.mxu0 0.0
        %454 = vmatpush2.msra.mxu0 0.0
        %455 = vmatprep.subr.mxu0 0.0
        %456 = vmatpush2.msra.mxu0 0.0
        %457 = vmatprep.mubr.f32.mxu0 0.0
        %458 = vmatmul.mubr.f32.gmra.mxu0 %v391
        %v459 = vpop.f32.mrf.mxu0
        %v460 = vadd.f32 %v387, %v459
        %v461 = vpop.f32.mrf.mxu0
        %v462 = vadd.f32 %v387, %v461
        %463 = vdwg.mxu0
        %v464 = vmul.f32 %v460, 0.1
        %v465 = vmul.f32 %v462, 0.1
        %v466 = vmax.f32 %v460, %v464
        %v467 = vmax.f32 %v462, %v465
        %v470 = vcombine.low %v466, %v467
        %472 = vst [vmem:[%s268] sm:$0xff] %v470
        %s473 = sand.u32 %s163, 1
        %s474 = scalar_lea.sflag [#allocation3], %s473
        %s475 = sand.u32 %s163, 1
        %s476 = smul.addr %s475, 8
        %s477 = scalar_lea.vmem [#allocation2], %s476
        // Predicated region
        $region41: #{tpu_custom_call.1} parent=39 // pred_check
          %p478 = pneg %p173
        $region42: #{tpu_custom_call.1} parent=39 // pred_check_branch
          %480 = sbr.rel (%p478) target = $region44
        $region43: #{tpu_custom_call.1} parent=39 // pred_region
          %s481 = smul.u32 2, %s24
          %s483 = ssub.s32 128, 128
          %484 = vsyncadd %s474, %s483
          %s485 = smul.addr %s23, 2
          %s486 = sadd.s32 %s481, %s485
          %s487 = smul.addr %s486, 64
          %s488 = scalar_lea.hbm %s5, %s487
          %s490 = sshll.u32 %s477, 4
          %s491 = int_to_ptr.vmem [resolvable:$true] %s490
          %493 = dma.vmem_to_hbm [thread:$0]  %s491, 128, %s488, %s474
        $region44: #{tpu_custom_call.1} parent=39 // pred_fallthru
          _
      $region40: #{tpu_custom_call.1} parent=5 // pred_fallthru
        _
      %p494 = scmp.le.s32.totalorder 2, %s14
      // Predicated region
      $region45: #{tpu_custom_call.1} parent=5 // pred_check
        %p495 = pneg %p494
      $region46: #{tpu_custom_call.1} parent=5 // pred_check_branch
        %497 = sbr.rel (%p495) target = $region48
      $region47: #{tpu_custom_call.1} parent=5 // pred_region
        %s498 = ssub.s32 %s14, 2
        // Predicated region
        $region49: #{tpu_custom_call.1} parent=47 // pred_check
          %p499 = pneg %p179
        $region50: #{tpu_custom_call.1} parent=47 // pred_check_branch
          %501 = sbr.rel (%p499) target = $region52
        $region51: #{tpu_custom_call.1} parent=47 // pred_region
          %s502 = sand.u32 %s164, 1
          %s503 = scalar_lea.sflag [#allocation3], %s502
          %s504 = sand.u32 %s164, 1
          %s505 = smul.addr %s504, 8
          %s506 = scalar_lea.vmem [#allocation2], %s505
          %507 = dma.done %s503, 128
        $region52: #{tpu_custom_call.1} parent=47 // pred_fallthru
          _
      $region48: #{tpu_custom_call.1} parent=5 // pred_fallthru
        _
    $region6: #{tpu_custom_call.1} parent=1 // loop_footer
      %s18 = sadd.s32 1, %s14
    $region7: #{tpu_custom_call.1} parent=1 // loop_footer_branch
      %13 = sbr.rel target = $region3
    $region8: #{tpu_custom_call.1} parent=1 // loop_exit
      _
    %508 = vsyncpa [#allocation3], 1
    %s509 = scalar_lea.sflag [#allocation3], 1
    %510 = vsyncpa %s509, 1

</llo_original>
